<compile_context>
chip_gen: v7x
topology: tpu7x:2x2x1
jax: 0.10.0
libtpu: 0.0.40
codegen_flags: <defaults>
</compile_context>

<pallas_src>
import jax
import jax.numpy as jnp
from jax import lax
from jax.experimental import pallas as pl
from jax.experimental.pallas import tpu as pltpu

NEG_SLOPE = 0.01  # F.leaky_relu default negative slope


def _round_up(x, m):
    return (x + m - 1) // m * m


def _make_resblock_kernel(L, C, K, n_subblocks, len_subblock, mxu_dtype):
    pad = (K - 1) // 2
    margin = 8                     # 8-aligned leading margin; last `pad` rows = left conv pad
    Lc = _round_up(L, 8)           # compute-window rows (8-aligned)
    ext_rows = margin + Lc + 8     # trailing 8 zero rows (>= pad) = right conv pad
    need_mask = Lc > L             # only if L is not a multiple of 8

    def kernel(x_ref, w_ref, b_ref, out_ref, ext):
        # ---- per-batch init: zero only the margin + tail rows, then copy the
        # real rows with an 8-aligned sublane start (straight unmasked copy).
        ext[0:margin, :] = jnp.zeros((margin, C), jnp.float32)
        ext[margin + L:ext_rows, :] = jnp.zeros((ext_rows - margin - L, C),
                                                jnp.float32)
        ext[margin:margin + L, :] = x_ref[0].astype(jnp.float32)

        # Hoisted multiplicative row mask (JAX does not CSE broadcasts, so build
        # it once outside the layer loop).  Unused when L is 8-aligned.
        if need_mask:
            ri = lax.broadcasted_iota(jnp.int32, (Lc, C), 0)
            row_mask = (ri < L).astype(jnp.float32)

        def subblock_body(sb, carry):
            x_old = ext[margin:margin + Lc, :]            # residual input (f32)
            for li in range(len_subblock):                # short fixed loop: unrolled
                layer = sb * len_subblock + li
                wl = w_ref[layer]                         # (K, C, C), VMEM-resident
                bl = b_ref[layer]                         # (1, C)
                acc = None
                # per-tap dot accumulation -- no im2col patches buffer
                for k in range(K):
                    tap = ext[margin - pad + k: margin - pad + k + Lc, :]
                    d = jnp.dot(tap.astype(mxu_dtype), wl[k],
                                preferred_element_type=jnp.float32)
                    acc = d if acc is None else acc + d
                acc = acc + bl                            # bias (broadcast add, f32)
                y = jnp.where(acc >= 0, acc, NEG_SLOPE * acc)   # leaky_relu (f32)
                if li == len_subblock - 1:
                    y = (y + x_old) * 0.5                 # (x + x_old) / 2
                if need_mask:
                    y = y * row_mask                      # keep 'same'-pad rows at zero
                ext[margin:margin + Lc, :] = y
            return carry

        lax.fori_loop(0, n_subblocks, subblock_body, 0)

        # ---- single, 8-aligned HBM write of this batch element ----
        out_ref[0] = ext[margin:margin + L, :].astype(out_ref.dtype)

    return kernel


def resblock_forward(x, params, *, mxu_dtype=jnp.float32):
    """Run the whole ResBlock in one pallas_call.

    x: (N, L, C) activations (NLC layout).
    params: list (subblocks) of list (layers) of (w_kio (K,C,C), b (1,C)).
    mxu_dtype: dtype of the matmul operands (use jnp.bfloat16 on v6e/v7x; all
        element-wise math stays f32 either way).
    """
    N, L, C = x.shape
    n_subblocks = len(params)
    len_subblock = len(params[0])
    flat = [lw for sub in params for lw in sub]
    n_total = len(flat)
    K = flat[0][0].shape[0]

    # Stack weights once: (n_layers, K, C, C) -> single DMA, VMEM-resident across
    # the whole grid (constant index_map below).
    w_stack = jnp.stack([w for (w, _) in flat]).astype(mxu_dtype)
    b_stack = jnp.stack([b for (_, b) in flat]).astype(jnp.float32)

    kernel = _make_resblock_kernel(L, C, K, n_subblocks, len_subblock, mxu_dtype)

    Lc = _round_up(L, 8)
    ext_rows = 8 + Lc + 8

    return pl.pallas_call(
        kernel,
        out_shape=jax.ShapeDtypeStruct((N, L, C), x.dtype),
        grid=(N,),
        in_specs=[
            pl.BlockSpec((1, L, C), lambda n: (n, 0, 0)),
            pl.BlockSpec((n_total, K, C, C), lambda n: (0, 0, 0, 0)),
            pl.BlockSpec((n_total, 1, C), lambda n: (0, 0, 0)),
        ],
        out_specs=pl.BlockSpec((1, L, C), lambda n: (n, 0, 0)),
        scratch_shapes=[
            pltpu.VMEM((ext_rows, C), jnp.float32),   # padded per-batch activations
        ],
        compiler_params=pltpu.CompilerParams(
            dimension_semantics=("parallel",),
            vmem_limit_bytes=32 * 1024 * 1024),
    )(x, w_stack, b_stack)


# ----------------------------- pure-JAX reference -----------------------------

def _conv1d_ref(x_nlc, w_kio, b):
    out = lax.conv_general_dilated(
        x_nlc, w_kio,
        window_strides=(1,),
        padding="SAME",
        dimension_numbers=("NWC", "WIO", "NWC"),
    )
    return out + b[None]


def resblock_ref(x, params):
    for subblock_params in params:
        x_old = x
        for (w, b) in subblock_params:
            x = _conv1d_ref(x, w, b)
            x = jnp.where(x >= 0, x, NEG_SLOPE * x)
        x = (x + x_old) / 2.0
    return x


# --------------------------------- params --------------------------------------

def init_params(key, n_res_subblocks, len_res_subblock, hidden, K=5):
    """Deterministic PyTorch-like init: U(-1/sqrt(fan_in), 1/sqrt(fan_in))."""
    params = []
    bound = 1.0 / jnp.sqrt(hidden * K)
    for _ in range(n_res_subblocks):
        layers = []
        for _ in range(len_res_subblock):
            key, kw, kb = jax.random.split(key, 3)
            # torch layout (C_out, C_in, K) -> kernel layout (K, C_in, C_out)
            w_torch = jax.random.uniform(
                kw, (hidden, hidden, K), jnp.float32, -bound, bound)
            b = jax.random.uniform(kb, (hidden,), jnp.float32, -bound, bound)
            w_kio = jnp.transpose(w_torch, (2, 1, 0))
            layers.append((w_kio, b.reshape(1, hidden)))
        params.append(layers)
    return params


# --------------------------------- main ---------------------------------------

if __name__ == "__main__":
    # Small ProcessConfig: hidden=32, n_res_subblocks=2, len_res_subblock=2
    N, L, HIDDEN = 2, 16, 32
    N_RES_SUBBLOCKS, LEN_RES_SUBBLOCK = 2, 2

    key = jax.random.PRNGKey(0)
    key, kx = jax.random.split(key)
    x = jax.random.normal(kx, (N, L, HIDDEN), jnp.float32)  # layout: NLC

    params = init_params(key, N_RES_SUBBLOCKS, LEN_RES_SUBBLOCK, HIDDEN)

    # f32 MXU operands here so we can check against the f32 reference at tight
    # tolerance; on v6e/v7x pass mxu_dtype=jnp.bfloat16 for the bf16-native MXU.
    out = resblock_forward(x, params, mxu_dtype=jnp.float32)
    out = jax.block_until_ready(out)

    ref = jax.block_until_ready(resblock_ref(x, params))
    assert out.shape == (N, L, HIDDEN)
    assert jnp.allclose(out, ref, atol=1e-4, rtol=1e-4), (
        float(jnp.max(jnp.abs(out - ref))))

    print("KERNEL_OK")
</pallas_src>

<mosaic_0001>
module attributes {stable_mosaic.version = 11 : i64} {
  func.func @kernel(%arg0: i32, %arg1: memref<1x16x32xf32, #tpu.memory_space<vmem>>, %arg2: memref<4x5x32x32xf32, #tpu.memory_space<vmem>>, %arg3: memref<4x1x32xf32, #tpu.memory_space<vmem>>, %arg4: memref<1x16x32xf32, #tpu.memory_space<vmem>>, %arg5: memref<32x32xf32, #tpu.memory_space<vmem>>) attributes {dimension_semantics = [#tpu.dimension_semantics<parallel>], iteration_bounds = array<i64: 2>, scalar_prefetch = 0 : i64, scratch_operands = 1 : i64, tpu.core_type = #tpu.core_type<tc>, window_params = [{transform_indices = @transform_0, window_bounds = array<i64: 1, 16, 32>}, {pipeline_mode = #tpu.pipeline_mode<synchronous>, transform_indices = @transform_1, window_bounds = array<i64: 4, 5, 32, 32>}, {pipeline_mode = #tpu.pipeline_mode<synchronous>, transform_indices = @transform_2, window_bounds = array<i64: 4, 1, 32>}, {transform_indices = @transform_3, window_bounds = array<i64: 1, 16, 32>}]} {
    %cst = arith.constant 0.000000e+00 : f32
    %0 = vector.broadcast %cst : f32 to vector<8x32xf32>
    %c0 = arith.constant 0 : index
    %c0_0 = arith.constant 0 : index
    %1 = vector.load %arg5[%c0, %c0_0] : memref<32x32xf32, #tpu.memory_space<vmem>>, vector<8x32xf32>
    tpu.vector_store %arg5[%c0, %c0_0], %0 {strides = array<i32>} : memref<32x32xf32, #tpu.memory_space<vmem>>, vector<8x32xf32>,
    %cst_1 = arith.constant 0.000000e+00 : f32
    %2 = vector.broadcast %cst_1 : f32 to vector<8x32xf32>
    %c24 = arith.constant 24 : index
    %c0_2 = arith.constant 0 : index
    %3 = vector.load %arg5[%c24, %c0_2] : memref<32x32xf32, #tpu.memory_space<vmem>>, vector<8x32xf32>
    tpu.vector_store %arg5[%c24, %c0_2], %2 {strides = array<i32>} : memref<32x32xf32, #tpu.memory_space<vmem>>, vector<8x32xf32>,
    %c0_3 = arith.constant 0 : index
    %c0_4 = arith.constant 0 : index
    %c0_5 = arith.constant 0 : index
    %4 = vector.load %arg1[%c0_3, %c0_4, %c0_5] : memref<1x16x32xf32, #tpu.memory_space<vmem>>, vector<1x16x32xf32>
    %5 = vector.shape_cast %4 : vector<1x16x32xf32> to vector<16x32xf32>
    %c8 = arith.constant 8 : index
    %c0_6 = arith.constant 0 : index
    %6 = vector.load %arg5[%c8, %c0_6] : memref<32x32xf32, #tpu.memory_space<vmem>>, vector<16x32xf32>
    tpu.vector_store %arg5[%c8, %c0_6], %5 {strides = array<i32>} : memref<32x32xf32, #tpu.memory_space<vmem>>, vector<16x32xf32>,
    %c0_i32 = arith.constant 0 : i32
    %c2_i32 = arith.constant 2 : i32
    %7 = arith.addi %c0_i32, %c2_i32 : i32
    %c1_i32 = arith.constant 1 : i32
    scf.for %arg6 = %c0_i32 to %7 step %c1_i32  : i32 {
      %c8_13 = arith.constant 8 : index
      %c0_14 = arith.constant 0 : index
      %12 = vector.load %arg5[%c8_13, %c0_14] : memref<32x32xf32, #tpu.memory_space<vmem>>, vector<16x32xf32>
      %c2_i32_15 = arith.constant 2 : i32
      %13 = arith.muli %arg6, %c2_i32_15 : i32
      %c0_i32_16 = arith.constant 0 : i32
      %14 = arith.addi %13, %c0_i32_16 : i32
      %15 = arith.index_cast %14 : i32 to index
      %c0_17 = arith.constant 0 : index
      %c0_18 = arith.constant 0 : index
      %c0_19 = arith.constant 0 : index
      %16 = vector.load %arg2[%15, %c0_17, %c0_18, %c0_19] : memref<4x5x32x32xf32, #tpu.memory_space<vmem>>, vector<1x5x32x32xf32>
      %17 = vector.shape_cast %16 : vector<1x5x32x32xf32> to vector<5x32x32xf32>
      %18 = arith.index_cast %14 : i32 to index
      %c0_20 = arith.constant 0 : index
      %c0_21 = arith.constant 0 : index
      %19 = vector.load %arg3[%18, %c0_20, %c0_21] : memref<4x1x32xf32, #tpu.memory_space<vmem>>, vector<1x1x32xf32>
      %20 = vector.shape_cast %19 : vector<1x1x32xf32> to vector<1x32xf32>
      %c6 = arith.constant 6 : index
      %c0_22 = arith.constant 0 : index
      %21 = vector.load %arg5[%c6, %c0_22] : memref<32x32xf32, #tpu.memory_space<vmem>>, vector<16x32xf32>
      %22 = vector.extract_strided_slice %17 {offsets = [0, 0, 0], sizes = [1, 32, 32], strides = [1, 1, 1]} : vector<5x32x32xf32> to vector<1x32x32xf32>
      %23 = vector.shape_cast %22 : vector<1x32x32xf32> to vector<32x32xf32>
      %cst_23 = arith.constant dense<0.000000e+00> : vector<16x32xf32>
      %24 = tpu.matmul %21, %23, %cst_23 {dimension_numbers = #tpu.dot_dimension_numbers<[1], [0], [0], [1], [0, 0, 1, 1], [], []>} : vector<16x32xf32>, vector<32x32xf32>, vector<16x32xf32> -> vector<16x32xf32>
      %c7 = arith.constant 7 : index
      %c0_24 = arith.constant 0 : index
      %25 = vector.load %arg5[%c7, %c0_24] : memref<32x32xf32, #tpu.memory_space<vmem>>, vector<16x32xf32>
      %26 = vector.extract_strided_slice %17 {offsets = [1, 0, 0], sizes = [1, 32, 32], strides = [1, 1, 1]} : vector<5x32x32xf32> to vector<1x32x32xf32>
      %27 = vector.shape_cast %26 : vector<1x32x32xf32> to vector<32x32xf32>
      %cst_25 = arith.constant dense<0.000000e+00> : vector<16x32xf32>
      %28 = tpu.matmul %25, %27, %cst_25 {dimension_numbers = #tpu.dot_dimension_numbers<[1], [0], [0], [1], [0, 0, 1, 1], [], []>} : vector<16x32xf32>, vector<32x32xf32>, vector<16x32xf32> -> vector<16x32xf32>
      %29 = arith.addf %24, %28 : vector<16x32xf32>
      %c8_26 = arith.constant 8 : index
      %c0_27 = arith.constant 0 : index
      %30 = vector.load %arg5[%c8_26, %c0_27] : memref<32x32xf32, #tpu.memory_space<vmem>>, vector<16x32xf32>
      %31 = vector.extract_strided_slice %17 {offsets = [2, 0, 0], sizes = [1, 32, 32], strides = [1, 1, 1]} : vector<5x32x32xf32> to vector<1x32x32xf32>
      %32 = vector.shape_cast %31 : vector<1x32x32xf32> to vector<32x32xf32>
      %cst_28 = arith.constant dense<0.000000e+00> : vector<16x32xf32>
      %33 = tpu.matmul %30, %32, %cst_28 {dimension_numbers = #tpu.dot_dimension_numbers<[1], [0], [0], [1], [0, 0, 1, 1], [], []>} : vector<16x32xf32>, vector<32x32xf32>, vector<16x32xf32> -> vector<16x32xf32>
      %34 = arith.addf %29, %33 : vector<16x32xf32>
      %c9 = arith.constant 9 : index
      %c0_29 = arith.constant 0 : index
      %35 = vector.load %arg5[%c9, %c0_29] : memref<32x32xf32, #tpu.memory_space<vmem>>, vector<16x32xf32>
      %36 = vector.extract_strided_slice %17 {offsets = [3, 0, 0], sizes = [1, 32, 32], strides = [1, 1, 1]} : vector<5x32x32xf32> to vector<1x32x32xf32>
      %37 = vector.shape_cast %36 : vector<1x32x32xf32> to vector<32x32xf32>
      %cst_30 = arith.constant dense<0.000000e+00> : vector<16x32xf32>
      %38 = tpu.matmul %35, %37, %cst_30 {dimension_numbers = #tpu.dot_dimension_numbers<[1], [0], [0], [1], [0, 0, 1, 1], [], []>} : vector<16x32xf32>, vector<32x32xf32>, vector<16x32xf32> -> vector<16x32xf32>
      %39 = arith.addf %34, %38 : vector<16x32xf32>
      %c10 = arith.constant 10 : index
      %c0_31 = arith.constant 0 : index
      %40 = vector.load %arg5[%c10, %c0_31] : memref<32x32xf32, #tpu.memory_space<vmem>>, vector<16x32xf32>
      %41 = vector.extract_strided_slice %17 {offsets = [4, 0, 0], sizes = [1, 32, 32], strides = [1, 1, 1]} : vector<5x32x32xf32> to vector<1x32x32xf32>
      %42 = vector.shape_cast %41 : vector<1x32x32xf32> to vector<32x32xf32>
      %cst_32 = arith.constant dense<0.000000e+00> : vector<16x32xf32>
      %43 = tpu.matmul %40, %42, %cst_32 {dimension_numbers = #tpu.dot_dimension_numbers<[1], [0], [0], [1], [0, 0, 1, 1], [], []>} : vector<16x32xf32>, vector<32x32xf32>, vector<16x32xf32> -> vector<16x32xf32>
      %44 = arith.addf %39, %43 : vector<16x32xf32>
      %45 = vector.broadcast %20 : vector<1x32xf32> to vector<16x32xf32>
      %46 = arith.addf %44, %45 : vector<16x32xf32>
      %cst_33 = arith.constant 0.000000e+00 : f32
      %47 = vector.broadcast %cst_33 : f32 to vector<16x32xf32>
      %48 = arith.cmpf oge, %46, %47 : vector<16x32xf32>
      %cst_34 = arith.constant 0.00999999977 : f32
      %49 = vector.broadcast %cst_34 : f32 to vector<16x32xf32>
      %50 = arith.mulf %49, %46 : vector<16x32xf32>
      %51 = arith.select %48, %46, %50 : vector<16x32xi1>, vector<16x32xf32>
      %c8_35 = arith.constant 8 : index
      %c0_36 = arith.constant 0 : index
      %52 = vector.load %arg5[%c8_35, %c0_36] : memref<32x32xf32, #tpu.memory_space<vmem>>, vector<16x32xf32>
      tpu.vector_store %arg5[%c8_35, %c0_36], %51 {strides = array<i32>} : memref<32x32xf32, #tpu.memory_space<vmem>>, vector<16x32xf32>,
      %c2_i32_37 = arith.constant 2 : i32
      %53 = arith.muli %arg6, %c2_i32_37 : i32
      %c1_i32_38 = arith.constant 1 : i32
      %54 = arith.addi %53, %c1_i32_38 : i32
      %55 = arith.index_cast %54 : i32 to index
      %c0_39 = arith.constant 0 : index
      %c0_40 = arith.constant 0 : index
      %c0_41 = arith.constant 0 : index
      %56 = vector.load %arg2[%55, %c0_39, %c0_40, %c0_41] : memref<4x5x32x32xf32, #tpu.memory_space<vmem>>, vector<1x5x32x32xf32>
      %57 = vector.shape_cast %56 : vector<1x5x32x32xf32> to vector<5x32x32xf32>
      %58 = arith.index_cast %54 : i32 to index
      %c0_42 = arith.constant 0 : index
      %c0_43 = arith.constant 0 : index
      %59 = vector.load %arg3[%58, %c0_42, %c0_43] : memref<4x1x32xf32, #tpu.memory_space<vmem>>, vector<1x1x32xf32>
      %60 = vector.shape_cast %59 : vector<1x1x32xf32> to vector<1x32xf32>
      %c6_44 = arith.constant 6 : index
      %c0_45 = arith.constant 0 : index
      %61 = vector.load %arg5[%c6_44, %c0_45] : memref<32x32xf32, #tpu.memory_space<vmem>>, vector<16x32xf32>
      %62 = vector.extract_strided_slice %57 {offsets = [0, 0, 0], sizes = [1, 32, 32], strides = [1, 1, 1]} : vector<5x32x32xf32> to vector<1x32x32xf32>
      %63 = vector.shape_cast %62 : vector<1x32x32xf32> to vector<32x32xf32>
      %cst_46 = arith.constant dense<0.000000e+00> : vector<16x32xf32>
      %64 = tpu.matmul %61, %63, %cst_46 {dimension_numbers = #tpu.dot_dimension_numbers<[1], [0], [0], [1], [0, 0, 1, 1], [], []>} : vector<16x32xf32>, vector<32x32xf32>, vector<16x32xf32> -> vector<16x32xf32>
      %c7_47 = arith.constant 7 : index
      %c0_48 = arith.constant 0 : index
      %65 = vector.load %arg5[%c7_47, %c0_48] : memref<32x32xf32, #tpu.memory_space<vmem>>, vector<16x32xf32>
      %66 = vector.extract_strided_slice %57 {offsets = [1, 0, 0], sizes = [1, 32, 32], strides = [1, 1, 1]} : vector<5x32x32xf32> to vector<1x32x32xf32>
      %67 = vector.shape_cast %66 : vector<1x32x32xf32> to vector<32x32xf32>
      %cst_49 = arith.constant dense<0.000000e+00> : vector<16x32xf32>
      %68 = tpu.matmul %65, %67, %cst_49 {dimension_numbers = #tpu.dot_dimension_numbers<[1], [0], [0], [1], [0, 0, 1, 1], [], []>} : vector<16x32xf32>, vector<32x32xf32>, vector<16x32xf32> -> vector<16x32xf32>
      %69 = arith.addf %64, %68 : vector<16x32xf32>
      %c8_50 = arith.constant 8 : index
      %c0_51 = arith.constant 0 : index
      %70 = vector.load %arg5[%c8_50, %c0_51] : memref<32x32xf32, #tpu.memory_space<vmem>>, vector<16x32xf32>
      %71 = vector.extract_strided_slice %57 {offsets = [2, 0, 0], sizes = [1, 32, 32], strides = [1, 1, 1]} : vector<5x32x32xf32> to vector<1x32x32xf32>
      %72 = vector.shape_cast %71 : vector<1x32x32xf32> to vector<32x32xf32>
      %cst_52 = arith.constant dense<0.000000e+00> : vector<16x32xf32>
      %73 = tpu.matmul %70, %72, %cst_52 {dimension_numbers = #tpu.dot_dimension_numbers<[1], [0], [0], [1], [0, 0, 1, 1], [], []>} : vector<16x32xf32>, vector<32x32xf32>, vector<16x32xf32> -> vector<16x32xf32>
      %74 = arith.addf %69, %73 : vector<16x32xf32>
      %c9_53 = arith.constant 9 : index
      %c0_54 = arith.constant 0 : index
      %75 = vector.load %arg5[%c9_53, %c0_54] : memref<32x32xf32, #tpu.memory_space<vmem>>, vector<16x32xf32>
      %76 = vector.extract_strided_slice %57 {offsets = [3, 0, 0], sizes = [1, 32, 32], strides = [1, 1, 1]} : vector<5x32x32xf32> to vector<1x32x32xf32>
      %77 = vector.shape_cast %76 : vector<1x32x32xf32> to vector<32x32xf32>
      %cst_55 = arith.constant dense<0.000000e+00> : vector<16x32xf32>
      %78 = tpu.matmul %75, %77, %cst_55 {dimension_numbers = #tpu.dot_dimension_numbers<[1], [0], [0], [1], [0, 0, 1, 1], [], []>} : vector<16x32xf32>, vector<32x32xf32>, vector<16x32xf32> -> vector<16x32xf32>
      %79 = arith.addf %74, %78 : vector<16x32xf32>
      %c10_56 = arith.constant 10 : index
      %c0_57 = arith.constant 0 : index
      %80 = vector.load %arg5[%c10_56, %c0_57] : memref<32x32xf32, #tpu.memory_space<vmem>>, vector<16x32xf32>
      %81 = vector.extract_strided_slice %57 {offsets = [4, 0, 0], sizes = [1, 32, 32], strides = [1, 1, 1]} : vector<5x32x32xf32> to vector<1x32x32xf32>
      %82 = vector.shape_cast %81 : vector<1x32x32xf32> to vector<32x32xf32>
      %cst_58 = arith.constant dense<0.000000e+00> : vector<16x32xf32>
      %83 = tpu.matmul %80, %82, %cst_58 {dimension_numbers = #tpu.dot_dimension_numbers<[1], [0], [0], [1], [0, 0, 1, 1], [], []>} : vector<16x32xf32>, vector<32x32xf32>, vector<16x32xf32> -> vector<16x32xf32>
      %84 = arith.addf %79, %83 : vector<16x32xf32>
      %85 = vector.broadcast %60 : vector<1x32xf32> to vector<16x32xf32>
      %86 = arith.addf %84, %85 : vector<16x32xf32>
      %cst_59 = arith.constant 0.000000e+00 : f32
      %87 = vector.broadcast %cst_59 : f32 to vector<16x32xf32>
      %88 = arith.cmpf oge, %86, %87 : vector<16x32xf32>
      %cst_60 = arith.constant 0.00999999977 : f32
      %89 = vector.broadcast %cst_60 : f32 to vector<16x32xf32>
      %90 = arith.mulf %89, %86 : vector<16x32xf32>
      %91 = arith.select %88, %86, %90 : vector<16x32xi1>, vector<16x32xf32>
      %92 = arith.addf %91, %12 : vector<16x32xf32>
      %cst_61 = arith.constant 5.000000e-01 : f32
      %93 = vector.broadcast %cst_61 : f32 to vector<16x32xf32>
      %94 = arith.mulf %92, %93 : vector<16x32xf32>
      %c8_62 = arith.constant 8 : index
      %c0_63 = arith.constant 0 : index
      %95 = vector.load %arg5[%c8_62, %c0_63] : memref<32x32xf32, #tpu.memory_space<vmem>>, vector<16x32xf32>
      tpu.vector_store %arg5[%c8_62, %c0_63], %94 {strides = array<i32>} : memref<32x32xf32, #tpu.memory_space<vmem>>, vector<16x32xf32>,
    }
    %c2_i32_7 = arith.constant 2 : i32
    %c8_8 = arith.constant 8 : index
    %c0_9 = arith.constant 0 : index
    %8 = vector.load %arg5[%c8_8, %c0_9] : memref<32x32xf32, #tpu.memory_space<vmem>>, vector<16x32xf32>
    %c0_10 = arith.constant 0 : index
    %c0_11 = arith.constant 0 : index
    %c0_12 = arith.constant 0 : index
    %9 = vector.load %arg4[%c0_10, %c0_11, %c0_12] : memref<1x16x32xf32, #tpu.memory_space<vmem>>, vector<1x16x32xf32>
    %10 = vector.shape_cast %9 : vector<1x16x32xf32> to vector<16x32xf32>
    %11 = vector.shape_cast %8 : vector<16x32xf32> to vector<1x16x32xf32>
    tpu.vector_store %arg4[%c0_10, %c0_11, %c0_12], %11 {strides = array<i32>} : memref<1x16x32xf32, #tpu.memory_space<vmem>>, vector<1x16x32xf32>,
    return
  }
  func.func @transform_0(%arg0: i32) -> (i32, i32, i32) {
    %c0_i32 = arith.constant 0 : i32
    %c0_i32_0 = arith.constant 0 : i32
    %c0_i32_1 = arith.constant 0 : i32
    return %arg0, %c0_i32, %c0_i32_0 : i32, i32, i32
  }
  func.func @transform_1(%arg0: i32) -> (i32, i32, i32, i32) {
    %c0_i32 = arith.constant 0 : i32
    %c0_i32_0 = arith.constant 0 : i32
    %c0_i32_1 = arith.constant 0 : i32
    %c0_i32_2 = arith.constant 0 : i32
    %c0_i32_3 = arith.constant 0 : i32
    return %c0_i32, %c0_i32_0, %c0_i32_1, %c0_i32_2 : i32, i32, i32, i32
  }
  func.func @transform_2(%arg0: i32) -> (i32, i32, i32) {
    %c0_i32 = arith.constant 0 : i32
    %c0_i32_0 = arith.constant 0 : i32
    %c0_i32_1 = arith.constant 0 : i32
    %c0_i32_2 = arith.constant 0 : i32
    return %c0_i32, %c0_i32_0, %c0_i32_1 : i32, i32, i32
  }
  func.func @transform_3(%arg0: i32) -> (i32, i32, i32) {
    %c0_i32 = arith.constant 0 : i32
    %c0_i32_0 = arith.constant 0 : i32
    %c0_i32_1 = arith.constant 0 : i32
    return %arg0, %c0_i32, %c0_i32_0 : i32, i32, i32
  }
}

</mosaic_0001>

<llo_original>
// kernel: tpu_custom_call.1
$region0: #{tpu_custom_call.1}
  #allocation0 [shape = 'u32[]', space=smem, size = 0x4, offset = 0x4, fixed_abs, tag = 'smem constant byte address 0x4 - core index']
  #allocation1 [shape = 'u32[144,128]{1,0:T(1,128)}', space=vmem, size = 0x12000, scoped, tag = 'internal scratch']
  #allocation2 [shape = 'f32[32,32]{1,0:T(8,128)}', space=vmem, size = 0x4000, scoped, tag = 'scratch operand']
  %s0 = inlined_call_operand.hbm [shape: f32[2,16,32], index: 0, kind: input, shape index: {}]
  %s1 = inlined_call_operand.hbm [shape: f32[4,5,32,32], index: 1, kind: input, shape index: {}]
  %s2 = inlined_call_operand.vmem [shape: f32[4,1,32], index: 2, kind: input, shape index: {}]
  %s3 = inlined_call_operand.hbm [shape: f32[2,16,32], index: 3, kind: output, shape index: {}]
  %s4 = sld [smem:[#allocation0]]
  $region60: #{tpu_custom_call.1} parent=0
    _
  %s6 = ssub.s32 1, %s4
  %s7 = scalar_select 0, %s6, %s4
  $region1: #{tpu_custom_call.1} parent=0
    #allocation3 [shape = 'u8[16384]{0}', space=vmem, size = 0x4000, scoped, tag = 'input window, operand 0']
    #allocation4 [shape = 's32[2]{0}', space=sflag, size = 0x8, scoped, tag = 'scoped memory for tpu_custom_call.1']
    #allocation5 [shape = 's32[2]{0}', space=sflag, size = 0x8, scoped, tag = 'scoped memory for tpu_custom_call.1']
    #allocation6 [shape = 'u8[327680]{0}', space=vmem, size = 0x50000, scoped, tag = 'input window, operand 1, single buffered']
    #allocation7 [shape = 's32[1]{0}', space=sflag, size = 0x4, scoped, tag = 'scoped memory for tpu_custom_call.1']
    #allocation8 [shape = 'u8[16384]{0}', space=vmem, size = 0x4000, scoped, tag = 'output window, operand 0']
    %8 = vsyncpa [#allocation4], 0
    %s9 = scalar_lea.sflag [#allocation4], 1
    %10 = vsyncpa %s9, 0
    %11 = vsyncpa [#allocation7], 0
    %12 = vsyncpa [#allocation5], 0
    %s13 = scalar_lea.sflag [#allocation5], 1
    %14 = vsyncpa %s13, 0
    loop: start=0, step=1, limit=4
    $region2: #{tpu_custom_call.1} parent=1 // loop_pre_header
      _
    $region3: #{tpu_custom_call.1} parent=1 // loop_header
      %s16 = sphi 0, %s20
      %p17 = scmp.ge.s32.totalorder %s16, 4
      %s26 = sphi 0, %s28
      %s29 = sphi 0, %s26
      %s30 = sphi 0, %s29
      %s46 = sphi 0, %s30
      %s50 = sphi 0, %s50
      %s52 = sphi 0, %s50
      %s53 = sphi 0, %s52
      %s67 = sphi 0, %s53
      %s71 = sphi 0, %s71
      %s73 = sphi 0, %s71
      %s74 = sphi 0, %s73
      %s88 = sphi 0, %s74
      %s94 = sphi 0, %s96
      %s97 = sphi 0, %s94
      %s98 = sphi 0, %s97
      %s114 = sphi 0, %s98
    $region4: #{tpu_custom_call.1} parent=1 // loop_header_branch
      %19 = sbr.rel (%p17) target = $region8
    $region5: #{tpu_custom_call.1} parent=1 // loop_body
      %s21 = ssub.s32 %s16, 1
      %s22 = ssub.s32 %s16, 2
      %s23 = sadd.s32 %s16, 1
      %s24 = ssub.s32 %s16, %s23
      %p25 = scmp.eq.s32.totalorder %s24, 0
      %s27 = sadd.s32 %s26, 1
      %s28 = scalar_select %p25, %s26, %s27
      %p31 = pneg %p25
      %p32 = scmp.eq.s32.totalorder %s16, 1
      %p33 = por %p31, %p32
      %p34 = scmp.ne.s32.totalorder %s26, %s29
      %p35 = scmp.eq.s32.totalorder %s16, 0
      %p36 = por %p34, %p35
      %p37 = scmp.ne.s32.totalorder %s26, %s29
      %p38 = scmp.eq.s32.totalorder %s21, 1
      %p39 = por %p37, %p38
      %p40 = scmp.ne.s32.totalorder %s29, %s30
      %p41 = scmp.eq.s32.totalorder %s21, 0
      %p42 = por %p40, %p41
      %p43 = scmp.ne.s32.totalorder %s29, %s30
      %p44 = scmp.eq.s32.totalorder %s22, 1
      %p45 = por %p43, %p44
      %p47 = scmp.ne.s32.totalorder %s30, %s46
      %p48 = scmp.eq.s32.totalorder %s22, 0
      %p49 = por %p47, %p48
      %s51 = sadd.s32 %s50, 1
      %p54 = scmp.eq.s32.totalorder %s16, 1
      %p55 = scmp.ne.s32.totalorder %s50, %s52
      %p56 = scmp.eq.s32.totalorder %s16, 0
      %p57 = por %p55, %p56
      %p58 = scmp.ne.s32.totalorder %s50, %s52
      %p59 = scmp.eq.s32.totalorder %s21, 1
      %p60 = por %p58, %p59
      %p61 = scmp.ne.s32.totalorder %s52, %s53
      %p62 = scmp.eq.s32.totalorder %s21, 0
      %p63 = por %p61, %p62
      %p64 = scmp.ne.s32.totalorder %s52, %s53
      %p65 = scmp.eq.s32.totalorder %s22, 1
      %p66 = por %p64, %p65
      %p68 = scmp.ne.s32.totalorder %s53, %s67
      %p69 = scmp.eq.s32.totalorder %s22, 0
      %p70 = por %p68, %p69
      %s72 = sadd.s32 %s71, 1
      %p75 = scmp.eq.s32.totalorder %s16, 1
      %p76 = scmp.ne.s32.totalorder %s71, %s73
      %p77 = scmp.eq.s32.totalorder %s16, 0
      %p78 = por %p76, %p77
      %p79 = scmp.ne.s32.totalorder %s71, %s73
      %p80 = scmp.eq.s32.totalorder %s21, 1
      %p81 = por %p79, %p80
      %p82 = scmp.ne.s32.totalorder %s73, %s74
      %p83 = scmp.eq.s32.totalorder %s21, 0
      %p84 = por %p82, %p83
      %p85 = scmp.ne.s32.totalorder %s73, %s74
      %p86 = scmp.eq.s32.totalorder %s22, 1
      %p87 = por %p85, %p86
      %p89 = scmp.ne.s32.totalorder %s74, %s88
      %p90 = scmp.eq.s32.totalorder %s22, 0
      %p91 = por %p89, %p90
      %s92 = ssub.s32 %s16, %s23
      %p93 = scmp.eq.s32.totalorder %s92, 0
      %s95 = sadd.s32 %s94, 1
      %s96 = scalar_select %p93, %s94, %s95
      %p99 = pneg %p93
      %p100 = scmp.eq.s32.totalorder %s16, 1
      %p101 = por %p99, %p100
      %p102 = scmp.ne.s32.totalorder %s94, %s97
      %p103 = scmp.eq.s32.totalorder %s16, 0
      %p104 = por %p102, %p103
      %p105 = scmp.ne.s32.totalorder %s94, %s97
      %p106 = scmp.eq.s32.totalorder %s21, 1
      %p107 = por %p105, %p106
      %p108 = scmp.ne.s32.totalorder %s97, %s98
      %p109 = scmp.eq.s32.totalorder %s21, 0
      %p110 = por %p108, %p109
      %p111 = scmp.ne.s32.totalorder %s97, %s98
      %p112 = scmp.eq.s32.totalorder %s22, 1
      %p113 = por %p111, %p112
      %p115 = scmp.ne.s32.totalorder %s98, %s114
      %p116 = scmp.eq.s32.totalorder %s22, 0
      %p117 = por %p115, %p116
      %p118 = scmp.le.s32.totalorder 1, %s16
      %p119 = scmp.lt.s32.totalorder %s16, 3
      %p120 = pnand %p118, %p119
      %p121 = pneg %p120
      // Predicated region
      $region9: #{tpu_custom_call.1} parent=5 // pred_check
        _
      $region10: #{tpu_custom_call.1} parent=5 // pred_check_branch
        %123 = sbr.rel (%p120) target = $region12
      $region11: #{tpu_custom_call.1} parent=5 // pred_region
        %s124 = ssub.s32 %s16, 1
        // Predicated region
        $region13: #{tpu_custom_call.1} parent=11 // pred_check
          %p125 = pneg %p63
        $region14: #{tpu_custom_call.1} parent=11 // pred_check_branch
          %127 = sbr.rel (%p125) target = $region16
        $region15: #{tpu_custom_call.1} parent=11 // pred_region
          %s129 = ssub.s32 10240, 10240
          %130 = vsyncadd [#allocation7], %s129
          %s131 = sshll.u32 [#allocation6], 4
          %s132 = int_to_ptr.vmem [resolvable:$true] %s131
          %137 = dma.hbm_to_vmem [thread:$0]  %s1, 10240, %s132, [#allocation7], 128, 128, 8
        $region16: #{tpu_custom_call.1} parent=11 // pred_fallthru
          _
        // Predicated region
        $region17: #{tpu_custom_call.1} parent=11 // pred_check
          %p138 = pneg %p84
        $region18: #{tpu_custom_call.1} parent=11 // pred_check_branch
          %140 = sbr.rel (%p138) target = $region20
        $region19: #{tpu_custom_call.1} parent=11 // pred_region
          _
        $region20: #{tpu_custom_call.1} parent=11 // pred_fallthru
          _
      $region12: #{tpu_custom_call.1} parent=5 // pred_fallthru
        _
      %p141 = scmp.lt.s32.totalorder %s16, 2
      // Predicated region
      $region21: #{tpu_custom_call.1} parent=5 // pred_check
        %p142 = pneg %p141
      $region22: #{tpu_custom_call.1} parent=5 // pred_check_branch
        %144 = sbr.rel (%p142) target = $region24
      $region23: #{tpu_custom_call.1} parent=5 // pred_region
        // Predicated region
        $region25: #{tpu_custom_call.1} parent=23 // pred_check
          %p145 = pneg %p36
        $region26: #{tpu_custom_call.1} parent=23 // pred_check_branch
          %147 = sbr.rel (%p145) target = $region28
        $region27: #{tpu_custom_call.1} parent=23 // pred_region
          %s148 = sand.u32 %s26, 1
          %s149 = scalar_lea.sflag [#allocation4], %s148
          %s150 = sand.u32 %s26, 1
          %s151 = smul.addr %s150, 16
          %s152 = scalar_lea.vmem [#allocation3], %s151
          %s154 = ssub.s32 256, 256
          %155 = vsyncadd %s149, %s154
          %s156 = smul.addr %s16, 2
          %s157 = smul.addr %s156, 128
          %s158 = scalar_lea.hbm %s0, %s157
          %s159 = sshll.u32 %s152, 4
          %s160 = int_to_ptr.vmem [resolvable:$true] %s159
          %165 = dma.hbm_to_vmem [thread:$0]  %s158, 256, %s160, %s149, 128, 128, 8
        $region28: #{tpu_custom_call.1} parent=23 // pred_fallthru
          _
      $region24: #{tpu_custom_call.1} parent=5 // pred_fallthru
        _
      %p166 = scmp.le.s32.totalorder 1, %s16
      %p167 = scmp.lt.s32.totalorder %s16, 3
      %p168 = pnand %p166, %p167
      %p169 = pneg %p168
      // Predicated region
      $region29: #{tpu_custom_call.1} parent=5 // pred_check
        _
      $region30: #{tpu_custom_call.1} parent=5 // pred_check_branch
        %171 = sbr.rel (%p168) target = $region32
      $region31: #{tpu_custom_call.1} parent=5 // pred_region
        %s172 = ssub.s32 %s16, 1
        %s173 = sand.u32 %s29, 1
        %s174 = scalar_lea.sflag [#allocation4], %s173
        %s175 = sand.u32 %s29, 1
        %s176 = smul.addr %s175, 16
        %s177 = scalar_lea.vmem [#allocation3], %s176
        // Predicated region
        $region33: #{tpu_custom_call.1} parent=31 // pred_check
          %p178 = pneg %p42
        $region34: #{tpu_custom_call.1} parent=31 // pred_check_branch
          %180 = sbr.rel (%p178) target = $region36
        $region35: #{tpu_custom_call.1} parent=31 // pred_region
          %181 = dma.done %s174, 256
        $region36: #{tpu_custom_call.1} parent=31 // pred_fallthru
          _
        // Predicated region
        $region37: #{tpu_custom_call.1} parent=31 // pred_check
          %p182 = pneg %p63
        $region38: #{tpu_custom_call.1} parent=31 // pred_check_branch
          %184 = sbr.rel (%p182) target = $region40
        $region39: #{tpu_custom_call.1} parent=31 // pred_region
          %185 = dma.done [#allocation7], 10240
        $region40: #{tpu_custom_call.1} parent=31 // pred_fallthru
          _
        %s186 = sand.u32 %s29, 1
        %s187 = scalar_lea.sflag [#allocation4], %s186
        %s188 = sand.u32 %s29, 1
        %s189 = smul.addr %s188, 16
        %s190 = scalar_lea.vmem [#allocation3], %s189
        %p191 = pneg %p42
        %p192 = pneg %p39
        %p193 = pneg %p63
        %p194 = pneg %p60
        %p195 = pneg %p84
        %p196 = pneg %p81
        %p197 = pneg %p110
        %p198 = pneg %p107
        %s199 = sand.u32 %s97, 1
        %s200 = scalar_lea.sflag [#allocation5], %s199
        %s201 = sand.u32 %s97, 1
        %s202 = smul.addr %s201, 16
        %s203 = scalar_lea.vmem [#allocation8], %s202
        %vm204 = vcmask 261120
        %205 = vst.msk [vmem:[#allocation2] sm:$0xff] %vm204, 0.0
        %206 = vst.msk [vmem:[#allocation2 + $0x18] sm:$0xff] %vm204, 0.0
        %v207 = vld [vmem:[%s177] sm:$0xff]
        %v208 = vld [vmem:[%s177 + $0x8] sm:$0xff]
        %209 = vst.msk [vmem:[#allocation2 + $0x8] sm:$0xff] %vm204, %v207
        %210 = vst.msk [vmem:[#allocation2 + $0x10] sm:$0xff] %vm204, %v208
        loop: start=0, step=1, limit=2
        $region41: #{tpu_custom_call.1} parent=31 // loop_pre_header
          _
        $region42: #{tpu_custom_call.1} parent=31 // loop_header
          %s212 = sphi 0, %s216
          %p213 = scmp.ge.s32.totalorder %s212, 2
        $region43: #{tpu_custom_call.1} parent=31 // loop_header_branch
          %215 = sbr.rel (%p213) target = $region47
        $region44: #{tpu_custom_call.1} parent=31 // loop_body
          %v217 = vld [vmem:[#allocation2 + $0x8] sm:$0xff]
          %v218 = vld [vmem:[#allocation2 + $0x10] sm:$0xff]
          %s219 = smul.u32 %s212, 2
          %s220 = smul.u32 %s219, 160
          %s221 = scalar_lea.vmem [#allocation6], %s220
          %v222 = vld [vmem:[%s221] sm:$0xff]
          %v223 = vld [vmem:[%s221 + $0x8] sm:$0xff]
          %v224 = vld [vmem:[%s221 + $0x10] sm:$0xff]
          %v225 = vld [vmem:[%s221 + $0x18] sm:$0xff]
          %v226 = vld [vmem:[%s221 + $0x20] sm:$0xff]
          %v227 = vld [vmem:[%s221 + $0x28] sm:$0xff]
          %v228 = vld [vmem:[%s221 + $0x30] sm:$0xff]
          %v229 = vld [vmem:[%s221 + $0x38] sm:$0xff]
          %v230 = vld [vmem:[%s221 + $0x40] sm:$0xff]
          %v231 = vld [vmem:[%s221 + $0x48] sm:$0xff]
          %v232 = vld [vmem:[%s221 + $0x50] sm:$0xff]
          %v233 = vld [vmem:[%s221 + $0x58] sm:$0xff]
          %v234 = vld [vmem:[%s221 + $0x60] sm:$0xff]
          %v235 = vld [vmem:[%s221 + $0x68] sm:$0xff]
          %v236 = vld [vmem:[%s221 + $0x70] sm:$0xff]
          %v237 = vld [vmem:[%s221 + $0x78] sm:$0xff]
          %v238 = vld [vmem:[%s221 + $0x80] sm:$0xff]
          %v239 = vld [vmem:[%s221 + $0x88] sm:$0xff]
          %v240 = vld [vmem:[%s221 + $0x90] sm:$0xff]
          %v241 = vld [vmem:[%s221 + $0x98] sm:$0xff]
          %s242 = scalar_lea.vmem %s2, %s219
          %v243 = vld [vmem:[%s242] sm:$0x1]
          %v244 = vld [vmem:[#allocation2 + $0x6] sm:$0xff]
          %v245 = vld [vmem:[#allocation2 + $0xe] sm:$0xff]
          %v246 = vld [vmem:[#allocation2 + $0x7] sm:$0xff]
          %v247 = vld [vmem:[#allocation2 + $0xf] sm:$0xff]
          %v249 = vsel %vm204, %v246, 0
          %v252 = vsel %vm204, %v247, 0
          %254 = vmatprep.subr.mxu0 0.0
          %255 = vmatpush1.msra.mxu0 %v226
          %256 = vmatprep.subr.mxu0 0.0
          %257 = vmatpush1.msra.mxu0 %v227
          %258 = vmatprep.subr.mxu0 0.0
          %259 = vmatpush1.msra.mxu0 %v228
          %260 = vmatprep.subr.mxu0 0.0
          %261 = vmatpush1.msra.mxu0 %v229
          %262 = vmatprep.subr.mxu0 0.0
          %263 = vmatpush1.msra.mxu0 0.0
          %264 = vmatprep.subr.mxu0 0.0
          %265 = vmatpush1.msra.mxu0 0.0
          %266 = vmatprep.subr.mxu0 0.0
          %267 = vmatpush1.msra.mxu0 0.0
          %268 = vmatprep.subr.mxu0 0.0
          %269 = vmatpush1.msra.mxu0 0.0
          %270 = vmatprep.subr.mxu0 0.0
          %271 = vmatpush1.msra.mxu0 0.0
          %272 = vmatprep.subr.mxu0 0.0
          %273 = vmatpush1.msra.mxu0 0.0
          %274 = vmatprep.subr.mxu0 0.0
          %275 = vmatpush1.msra.mxu0 0.0
          %276 = vmatprep.subr.mxu0 0.0
          %277 = vmatpush1.msra.mxu0 0.0
          %278 = vmatprep.subr.mxu0 0.0
          %279 = vmatpush1.msra.mxu0 0.0
          %280 = vmatprep.subr.mxu0 0.0
          %281 = vmatpush1.msra.mxu0 0.0
          %282 = vmatprep.subr.mxu0 0.0
          %283 = vmatpush1.msra.mxu0 0.0
          %284 = vmatprep.subr.mxu0 0.0
          %285 = vmatpush1.msra.mxu0 0.0
          %286 = vmatprep.subr.mxu0 0.0
          %287 = vmatpush1.msra.mxu0 0.0
          %288 = vmatprep.subr.mxu0 0.0
          %289 = vmatpush1.msra.mxu0 0.0
          %290 = vmatprep.subr.mxu0 0.0
          %291 = vmatpush1.msra.mxu0 0.0
          %292 = vmatprep.subr.mxu0 0.0
          %293 = vmatpush1.msra.mxu0 0.0
          %294 = vmatprep.subr.mxu0 0.0
          %295 = vmatpush1.msra.mxu0 0.0
          %296 = vmatprep.subr.mxu0 0.0
          %297 = vmatpush1.msra.mxu0 0.0
          %298 = vmatprep.subr.mxu0 0.0
          %299 = vmatpush1.msra.mxu0 0.0
          %300 = vmatprep.subr.mxu0 0.0
          %301 = vmatpush1.msra.mxu0 0.0
          %302 = vmatprep.subr.mxu0 0.0
          %303 = vmatpush1.msra.mxu0 0.0
          %304 = vmatprep.subr.mxu0 0.0
          %305 = vmatpush1.msra.mxu0 0.0
          %306 = vmatprep.subr.mxu0 0.0
          %307 = vmatpush1.msra.mxu0 0.0
          %308 = vmatprep.subr.mxu0 0.0
          %309 = vmatpush1.msra.mxu0 0.0
          %310 = vmatprep.subr.mxu0 0.0
          %311 = vmatpush1.msra.mxu0 0.0
          %312 = vmatprep.subr.mxu0 0.0
          %313 = vmatpush1.msra.mxu0 0.0
          %314 = vmatprep.subr.mxu0 0.0
          %315 = vmatpush1.msra.mxu0 0.0
          %316 = vmatprep.subr.mxu0 0.0
          %317 = vmatpush1.msra.mxu0 0.0
          %318 = vmatprep.mubr.f32.mxu0 0.0
          %319 = vmatmul.mubr.f32.gmra.mrb[0].mxu0 %v249
          %v320 = vpop.f32.mrb[0].mxu0
          %v321 = vadd.f32 0.0, %v320
          %v322 = vpop.f32.mrb[0].mxu0
          %323 = vmatprep.mubr.f32.mxu0 0.0
          %324 = vmatmul.mubr.f32.gmra.mrb[0].mxu0 %v252
          %v325 = vpop.f32.mrb[0].mxu0
          %v326 = vadd.f32 0.0, %v325
          %v327 = vpop.f32.mrb[0].mxu0
          %328 = vdwg.mxu0
          %v330 = vsel %vm204, %v244, 0
          %v333 = vsel %vm204, %v245, 0
          %335 = vmatprep.subr.mxu0 0.0
          %336 = vmatpush1.msra.mxu0 %v222
          %337 = vmatprep.subr.mxu0 0.0
          %338 = vmatpush1.msra.mxu0 %v223
          %339 = vmatprep.subr.mxu0 0.0
          %340 = vmatpush1.msra.mxu0 %v224
          %341 = vmatprep.subr.mxu0 0.0
          %342 = vmatpush1.msra.mxu0 %v225
          %343 = vmatprep.subr.mxu0 0.0
          %344 = vmatpush1.msra.mxu0 0.0
          %345 = vmatprep.subr.mxu0 0.0
          %346 = vmatpush1.msra.mxu0 0.0
          %347 = vmatprep.subr.mxu0 0.0
          %348 = vmatpush1.msra.mxu0 0.0
          %349 = vmatprep.subr.mxu0 0.0
          %350 = vmatpush1.msra.mxu0 0.0
          %351 = vmatprep.subr.mxu0 0.0
          %352 = vmatpush1.msra.mxu0 0.0
          %353 = vmatprep.subr.mxu0 0.0
          %354 = vmatpush1.msra.mxu0 0.0
          %355 = vmatprep.subr.mxu0 0.0
          %356 = vmatpush1.msra.mxu0 0.0
          %357 = vmatprep.subr.mxu0 0.0
          %358 = vmatpush1.msra.mxu0 0.0
          %359 = vmatprep.subr.mxu0 0.0
          %360 = vmatpush1.msra.mxu0 0.0
          %361 = vmatprep.subr.mxu0 0.0
          %362 = vmatpush1.msra.mxu0 0.0
          %363 = vmatprep.subr.mxu0 0.0
          %364 = vmatpush1.msra.mxu0 0.0
          %365 = vmatprep.subr.mxu0 0.0
          %366 = vmatpush1.msra.mxu0 0.0
          %367 = vmatprep.subr.mxu0 0.0
          %368 = vmatpush1.msra.mxu0 0.0
          %369 = vmatprep.subr.mxu0 0.0
          %370 = vmatpush1.msra.mxu0 0.0
          %371 = vmatprep.subr.mxu0 0.0
          %372 = vmatpush1.msra.mxu0 0.0
          %373 = vmatprep.subr.mxu0 0.0
          %374 = vmatpush1.msra.mxu0 0.0
          %375 = vmatprep.subr.mxu0 0.0
          %376 = vmatpush1.msra.mxu0 0.0
          %377 = vmatprep.subr.mxu0 0.0
          %378 = vmatpush1.msra.mxu0 0.0
          %379 = vmatprep.subr.mxu0 0.0
          %380 = vmatpush1.msra.mxu0 0.0
          %381 = vmatprep.subr.mxu0 0.0
          %382 = vmatpush1.msra.mxu0 0.0
          %383 = vmatprep.subr.mxu0 0.0
          %384 = vmatpush1.msra.mxu0 0.0
          %385 = vmatprep.subr.mxu0 0.0
          %386 = vmatpush1.msra.mxu0 0.0
          %387 = vmatprep.subr.mxu0 0.0
          %388 = vmatpush1.msra.mxu0 0.0
          %389 = vmatprep.subr.mxu0 0.0
          %390 = vmatpush1.msra.mxu0 0.0
          %391 = vmatprep.subr.mxu0 0.0
          %392 = vmatpush1.msra.mxu0 0.0
          %393 = vmatprep.subr.mxu0 0.0
          %394 = vmatpush1.msra.mxu0 0.0
          %395 = vmatprep.subr.mxu0 0.0
          %396 = vmatpush1.msra.mxu0 0.0
          %397 = vmatprep.subr.mxu0 0.0
          %398 = vmatpush1.msra.mxu0 0.0
          %399 = vmatprep.mubr.f32.mxu0 0.0
          %400 = vmatmul.mubr.f32.gmra.mrb[0].mxu0 %v330
          %v401 = vpop.f32.mrb[0].mxu0
          %v402 = vadd.f32 %v321, %v401
          %v403 = vpop.f32.mrb[0].mxu0
          %404 = vmatprep.mubr.f32.mxu0 0.0
          %405 = vmatmul.mubr.f32.gmra.mrb[0].mxu0 %v333
          %v406 = vpop.f32.mrb[0].mxu0
          %v407 = vadd.f32 %v326, %v406
          %v408 = vpop.f32.mrb[0].mxu0
          %409 = vdwg.mxu0
          %v411 = vsel %vm204, %v217, 0
          %v414 = vsel %vm204, %v218, 0
          %416 = vmatprep.subr.mxu0 0.0
          %417 = vmatpush1.msra.mxu0 %v230
          %418 = vmatprep.subr.mxu0 0.0
          %419 = vmatpush1.msra.mxu0 %v231
          %420 = vmatprep.subr.mxu0 0.0
          %421 = vmatpush1.msra.mxu0 %v232
          %422 = vmatprep.subr.mxu0 0.0
          %423 = vmatpush1.msra.mxu0 %v233
          %424 = vmatprep.subr.mxu0 0.0
          %425 = vmatpush1.msra.mxu0 0.0
          %426 = vmatprep.subr.mxu0 0.0
          %427 = vmatpush1.msra.mxu0 0.0
          %428 = vmatprep.subr.mxu0 0.0
          %429 = vmatpush1.msra.mxu0 0.0
          %430 = vmatprep.subr.mxu0 0.0
          %431 = vmatpush1.msra.mxu0 0.0
          %432 = vmatprep.subr.mxu0 0.0
          %433 = vmatpush1.msra.mxu0 0.0
          %434 = vmatprep.subr.mxu0 0.0
          %435 = vmatpush1.msra.mxu0 0.0
          %436 = vmatprep.subr.mxu0 0.0
          %437 = vmatpush1.msra.mxu0 0.0
          %438 = vmatprep.subr.mxu0 0.0
          %439 = vmatpush1.msra.mxu0 0.0
          %440 = vmatprep.subr.mxu0 0.0
          %441 = vmatpush1.msra.mxu0 0.0
          %442 = vmatprep.subr.mxu0 0.0
          %443 = vmatpush1.msra.mxu0 0.0
          %444 = vmatprep.subr.mxu0 0.0
          %445 = vmatpush1.msra.mxu0 0.0
          %446 = vmatprep.subr.mxu0 0.0
          %447 = vmatpush1.msra.mxu0 0.0
          %448 = vmatprep.subr.mxu0 0.0
          %449 = vmatpush1.msra.mxu0 0.0
          %450 = vmatprep.subr.mxu0 0.0
          %451 = vmatpush1.msra.mxu0 0.0
          %452 = vmatprep.subr.mxu0 0.0
          %453 = vmatpush1.msra.mxu0 0.0
          %454 = vmatprep.subr.mxu0 0.0
          %455 = vmatpush1.msra.mxu0 0.0
          %456 = vmatprep.subr.mxu0 0.0
          %457 = vmatpush1.msra.mxu0 0.0
          %458 = vmatprep.subr.mxu0 0.0
          %459 = vmatpush1.msra.mxu0 0.0
          %460 = vmatprep.subr.mxu0 0.0
          %461 = vmatpush1.msra.mxu0 0.0
          %462 = vmatprep.subr.mxu0 0.0
          %463 = vmatpush1.msra.mxu0 0.0
          %464 = vmatprep.subr.mxu0 0.0
          %465 = vmatpush1.msra.mxu0 0.0
          %466 = vmatprep.subr.mxu0 0.0
          %467 = vmatpush1.msra.mxu0 0.0
          %468 = vmatprep.subr.mxu0 0.0
          %469 = vmatpush1.msra.mxu0 0.0
          %470 = vmatprep.subr.mxu0 0.0
          %471 = vmatpush1.msra.mxu0 0.0
          %472 = vmatprep.subr.mxu0 0.0
          %473 = vmatpush1.msra.mxu0 0.0
          %474 = vmatprep.subr.mxu0 0.0
          %475 = vmatpush1.msra.mxu0 0.0
          %476 = vmatprep.subr.mxu0 0.0
          %477 = vmatpush1.msra.mxu0 0.0
          %478 = vmatprep.subr.mxu0 0.0
          %479 = vmatpush1.msra.mxu0 0.0
          %480 = vmatprep.mubr.f32.mxu0 0.0
          %481 = vmatmul.mubr.f32.gmra.mrb[0].mxu0 %v411
          %v482 = vpop.f32.mrb[0].mxu0
          %v483 = vadd.f32 0.0, %v482
          %v484 = vpop.f32.mrb[0].mxu0
          %485 = vmatprep.mubr.f32.mxu0 0.0
          %486 = vmatmul.mubr.f32.gmra.mrb[0].mxu0 %v414
          %v487 = vpop.f32.mrb[0].mxu0
          %v488 = vadd.f32 0.0, %v487
          %v489 = vpop.f32.mrb[0].mxu0
          %490 = vdwg.mxu0
          %v491 = vadd.f32 %v402, %v483
          %v492 = vadd.f32 %v407, %v488
          %v493 = vld [vmem:[#allocation2 + $0x9] sm:$0xff]
          %v494 = vld [vmem:[#allocation2 + $0x11] sm:$0xff]
          %v496 = vsel %vm204, %v493, 0
          %v499 = vsel %vm204, %v494, 0
          %501 = vmatprep.subr.mxu0 0.0
          %502 = vmatpush1.msra.mxu0 %v234
          %503 = vmatprep.subr.mxu0 0.0
          %504 = vmatpush1.msra.mxu0 %v235
          %505 = vmatprep.subr.mxu0 0.0
          %506 = vmatpush1.msra.mxu0 %v236
          %507 = vmatprep.subr.mxu0 0.0
          %508 = vmatpush1.msra.mxu0 %v237
          %509 = vmatprep.subr.mxu0 0.0
          %510 = vmatpush1.msra.mxu0 0.0
          %511 = vmatprep.subr.mxu0 0.0
          %512 = vmatpush1.msra.mxu0 0.0
          %513 = vmatprep.subr.mxu0 0.0
          %514 = vmatpush1.msra.mxu0 0.0
          %515 = vmatprep.subr.mxu0 0.0
          %516 = vmatpush1.msra.mxu0 0.0
          %517 = vmatprep.subr.mxu0 0.0
          %518 = vmatpush1.msra.mxu0 0.0
          %519 = vmatprep.subr.mxu0 0.0
          %520 = vmatpush1.msra.mxu0 0.0
          %521 = vmatprep.subr.mxu0 0.0
          %522 = vmatpush1.msra.mxu0 0.0
          %523 = vmatprep.subr.mxu0 0.0
          %524 = vmatpush1.msra.mxu0 0.0
          %525 = vmatprep.subr.mxu0 0.0
          %526 = vmatpush1.msra.mxu0 0.0
          %527 = vmatprep.subr.mxu0 0.0
          %528 = vmatpush1.msra.mxu0 0.0
          %529 = vmatprep.subr.mxu0 0.0
          %530 = vmatpush1.msra.mxu0 0.0
          %531 = vmatprep.subr.mxu0 0.0
          %532 = vmatpush1.msra.mxu0 0.0
          %533 = vmatprep.subr.mxu0 0.0
          %534 = vmatpush1.msra.mxu0 0.0
          %535 = vmatprep.subr.mxu0 0.0
          %536 = vmatpush1.msra.mxu0 0.0
          %537 = vmatprep.subr.mxu0 0.0
          %538 = vmatpush1.msra.mxu0 0.0
          %539 = vmatprep.subr.mxu0 0.0
          %540 = vmatpush1.msra.mxu0 0.0
          %541 = vmatprep.subr.mxu0 0.0
          %542 = vmatpush1.msra.mxu0 0.0
          %543 = vmatprep.subr.mxu0 0.0
          %544 = vmatpush1.msra.mxu0 0.0
          %545 = vmatprep.subr.mxu0 0.0
          %546 = vmatpush1.msra.mxu0 0.0
          %547 = vmatprep.subr.mxu0 0.0
          %548 = vmatpush1.msra.mxu0 0.0
          %549 = vmatprep.subr.mxu0 0.0
          %550 = vmatpush1.msra.mxu0 0.0
          %551 = vmatprep.subr.mxu0 0.0
          %552 = vmatpush1.msra.mxu0 0.0
          %553 = vmatprep.subr.mxu0 0.0
          %554 = vmatpush1.msra.mxu0 0.0
          %555 = vmatprep.subr.mxu0 0.0
          %556 = vmatpush1.msra.mxu0 0.0
          %557 = vmatprep.subr.mxu0 0.0
          %558 = vmatpush1.msra.mxu0 0.0
          %559 = vmatprep.subr.mxu0 0.0
          %560 = vmatpush1.msra.mxu0 0.0
          %561 = vmatprep.subr.mxu0 0.0
          %562 = vmatpush1.msra.mxu0 0.0
          %563 = vmatprep.subr.mxu0 0.0
          %564 = vmatpush1.msra.mxu0 0.0
          %565 = vmatprep.mubr.f32.mxu0 0.0
          %566 = vmatmul.mubr.f32.gmra.mrb[0].mxu0 %v496
          %v567 = vpop.f32.mrb[0].mxu0
          %v568 = vadd.f32 0.0, %v567
          %v569 = vpop.f32.mrb[0].mxu0
          %570 = vmatprep.mubr.f32.mxu0 0.0
          %571 = vmatmul.mubr.f32.gmra.mrb[0].mxu0 %v499
          %v572 = vpop.f32.mrb[0].mxu0
          %v573 = vadd.f32 0.0, %v572
          %v574 = vpop.f32.mrb[0].mxu0
          %575 = vdwg.mxu0
          %v576 = vadd.f32 %v491, %v568
          %v577 = vadd.f32 %v492, %v573
          %v578 = vld [vmem:[#allocation2 + $0xa] sm:$0xff]
          %v579 = vld [vmem:[#allocation2 + $0x12] sm:$0xff]
          %v581 = vsel %vm204, %v578, 0
          %v584 = vsel %vm204, %v579, 0
          %586 = vmatprep.subr.mxu0 0.0
          %587 = vmatpush1.msra.mxu0 %v238
          %588 = vmatprep.subr.mxu0 0.0
          %589 = vmatpush1.msra.mxu0 %v239
          %590 = vmatprep.subr.mxu0 0.0
          %591 = vmatpush1.msra.mxu0 %v240
          %592 = vmatprep.subr.mxu0 0.0
          %593 = vmatpush1.msra.mxu0 %v241
          %594 = vmatprep.subr.mxu0 0.0
          %595 = vmatpush1.msra.mxu0 0.0
          %596 = vmatprep.subr.mxu0 0.0
          %597 = vmatpush1.msra.mxu0 0.0
          %598 = vmatprep.subr.mxu0 0.0
          %599 = vmatpush1.msra.mxu0 0.0
          %600 = vmatprep.subr.mxu0 0.0
          %601 = vmatpush1.msra.mxu0 0.0
          %602 = vmatprep.subr.mxu0 0.0
          %603 = vmatpush1.msra.mxu0 0.0
          %604 = vmatprep.subr.mxu0 0.0
          %605 = vmatpush1.msra.mxu0 0.0
          %606 = vmatprep.subr.mxu0 0.0
          %607 = vmatpush1.msra.mxu0 0.0
          %608 = vmatprep.subr.mxu0 0.0
          %609 = vmatpush1.msra.mxu0 0.0
          %610 = vmatprep.subr.mxu0 0.0
          %611 = vmatpush1.msra.mxu0 0.0
          %612 = vmatprep.subr.mxu0 0.0
          %613 = vmatpush1.msra.mxu0 0.0
          %614 = vmatprep.subr.mxu0 0.0
          %615 = vmatpush1.msra.mxu0 0.0
          %616 = vmatprep.subr.mxu0 0.0
          %617 = vmatpush1.msra.mxu0 0.0
          %618 = vmatprep.subr.mxu0 0.0
          %619 = vmatpush1.msra.mxu0 0.0
          %620 = vmatprep.subr.mxu0 0.0
          %621 = vmatpush1.msra.mxu0 0.0
          %622 = vmatprep.subr.mxu0 0.0
          %623 = vmatpush1.msra.mxu0 0.0
          %624 = vmatprep.subr.mxu0 0.0
          %625 = vmatpush1.msra.mxu0 0.0
          %626 = vmatprep.subr.mxu0 0.0
          %627 = vmatpush1.msra.mxu0 0.0
          %628 = vmatprep.subr.mxu0 0.0
          %629 = vmatpush1.msra.mxu0 0.0
          %630 = vmatprep.subr.mxu0 0.0
          %631 = vmatpush1.msra.mxu0 0.0
          %632 = vmatprep.subr.mxu0 0.0
          %633 = vmatpush1.msra.mxu0 0.0
          %634 = vmatprep.subr.mxu0 0.0
          %635 = vmatpush1.msra.mxu0 0.0
          %636 = vmatprep.subr.mxu0 0.0
          %637 = vmatpush1.msra.mxu0 0.0
          %638 = vmatprep.subr.mxu0 0.0
          %639 = vmatpush1.msra.mxu0 0.0
          %640 = vmatprep.subr.mxu0 0.0
          %641 = vmatpush1.msra.mxu0 0.0
          %642 = vmatprep.subr.mxu0 0.0
          %643 = vmatpush1.msra.mxu0 0.0
          %644 = vmatprep.subr.mxu0 0.0
          %645 = vmatpush1.msra.mxu0 0.0
          %646 = vmatprep.subr.mxu0 0.0
          %647 = vmatpush1.msra.mxu0 0.0
          %648 = vmatprep.subr.mxu0 0.0
          %649 = vmatpush1.msra.mxu0 0.0
          %650 = vmatprep.mubr.f32.mxu0 0.0
          %651 = vmatmul.mubr.f32.gmra.mrb[0].mxu0 %v581
          %v652 = vpop.f32.mrb[0].mxu0
          %v653 = vadd.f32 0.0, %v652
          %v654 = vpop.f32.mrb[0].mxu0
          %655 = vmatprep.mubr.f32.mxu0 0.0
          %656 = vmatmul.mubr.f32.gmra.mrb[0].mxu0 %v584
          %v657 = vpop.f32.mrb[0].mxu0
          %v658 = vadd.f32 0.0, %v657
          %v659 = vpop.f32.mrb[0].mxu0
          %660 = vdwg.mxu0
          %v661 = vadd.f32 %v576, %v653
          %v662 = vadd.f32 %v577, %v658
          %v664 = vlaneseq
          %v665 = vshrl.u32 %v664, 7
          %v666 = vsub.s32 0, %v665
          %v667 = vrot.slane %v243, %v666
          %v669 = vadd.f32 %v661, %v667
          %v670 = vadd.f32 %v662, %v667
          %vm671 = vcmp.ge.f32.partialorder %v669, 0.0
          %vm672 = vcmp.ge.f32.partialorder %v670, 0.0
          %v673 = vmul.f32 %v669, 0.01
          %v674 = vmul.f32 %v670, 0.01
          %v675 = vsel %vm671, %v669, %v673
          %v676 = vsel %vm672, %v670, %v674
          %677 = vst.msk [vmem:[#allocation2 + $0x8] sm:$0xff] %vm204, %v675
          %678 = vst.msk [vmem:[#allocation2 + $0x10] sm:$0xff] %vm204, %v676
          %s679 = sadd.s32 %s219, 1
          %s680 = smul.u32 %s679, 160
          %s681 = scalar_lea.vmem [#allocation6], %s680
          %v682 = vld [vmem:[%s681] sm:$0xff]
          %v683 = vld [vmem:[%s681 + $0x8] sm:$0xff]
          %v684 = vld [vmem:[%s681 + $0x10] sm:$0xff]
          %v685 = vld [vmem:[%s681 + $0x18] sm:$0xff]
          %v686 = vld [vmem:[%s681 + $0x20] sm:$0xff]
          %v687 = vld [vmem:[%s681 + $0x28] sm:$0xff]
          %v688 = vld [vmem:[%s681 + $0x30] sm:$0xff]
          %v689 = vld [vmem:[%s681 + $0x38] sm:$0xff]
          %v690 = vld [vmem:[%s681 + $0x40] sm:$0xff]
          %v691 = vld [vmem:[%s681 + $0x48] sm:$0xff]
          %v692 = vld [vmem:[%s681 + $0x50] sm:$0xff]
          %v693 = vld [vmem:[%s681 + $0x58] sm:$0xff]
          %v694 = vld [vmem:[%s681 + $0x60] sm:$0xff]
          %v695 = vld [vmem:[%s681 + $0x68] sm:$0xff]
          %v696 = vld [vmem:[%s681 + $0x70] sm:$0xff]
          %v697 = vld [vmem:[%s681 + $0x78] sm:$0xff]
          %v698 = vld [vmem:[%s681 + $0x80] sm:$0xff]
          %v699 = vld [vmem:[%s681 + $0x88] sm:$0xff]
          %v700 = vld [vmem:[%s681 + $0x90] sm:$0xff]
          %v701 = vld [vmem:[%s681 + $0x98] sm:$0xff]
          %s702 = scalar_lea.vmem %s2, %s679
          %v703 = vld [vmem:[%s702] sm:$0x1]
          %v704 = vld [vmem:[#allocation2 + $0x6] sm:$0xff]
          %v705 = vld [vmem:[#allocation2 + $0xe] sm:$0xff]
          %v706 = vld [vmem:[#allocation2 + $0x7] sm:$0xff]
          %v707 = vld [vmem:[#allocation2 + $0xf] sm:$0xff]
          %v709 = vsel %vm204, %v706, 0
          %v712 = vsel %vm204, %v707, 0
          %714 = vmatprep.subr.mxu0 0.0
          %715 = vmatpush1.msra.mxu0 %v686
          %716 = vmatprep.subr.mxu0 0.0
          %717 = vmatpush1.msra.mxu0 %v687
          %718 = vmatprep.subr.mxu0 0.0
          %719 = vmatpush1.msra.mxu0 %v688
          %720 = vmatprep.subr.mxu0 0.0
          %721 = vmatpush1.msra.mxu0 %v689
          %722 = vmatprep.subr.mxu0 0.0
          %723 = vmatpush1.msra.mxu0 0.0
          %724 = vmatprep.subr.mxu0 0.0
          %725 = vmatpush1.msra.mxu0 0.0
          %726 = vmatprep.subr.mxu0 0.0
          %727 = vmatpush1.msra.mxu0 0.0
          %728 = vmatprep.subr.mxu0 0.0
          %729 = vmatpush1.msra.mxu0 0.0
          %730 = vmatprep.subr.mxu0 0.0
          %731 = vmatpush1.msra.mxu0 0.0
          %732 = vmatprep.subr.mxu0 0.0
          %733 = vmatpush1.msra.mxu0 0.0
          %734 = vmatprep.subr.mxu0 0.0
          %735 = vmatpush1.msra.mxu0 0.0
          %736 = vmatprep.subr.mxu0 0.0
          %737 = vmatpush1.msra.mxu0 0.0
          %738 = vmatprep.subr.mxu0 0.0
          %739 = vmatpush1.msra.mxu0 0.0
          %740 = vmatprep.subr.mxu0 0.0
          %741 = vmatpush1.msra.mxu0 0.0
          %742 = vmatprep.subr.mxu0 0.0
          %743 = vmatpush1.msra.mxu0 0.0
          %744 = vmatprep.subr.mxu0 0.0
          %745 = vmatpush1.msra.mxu0 0.0
          %746 = vmatprep.subr.mxu0 0.0
          %747 = vmatpush1.msra.mxu0 0.0
          %748 = vmatprep.subr.mxu0 0.0
          %749 = vmatpush1.msra.mxu0 0.0
          %750 = vmatprep.subr.mxu0 0.0
          %751 = vmatpush1.msra.mxu0 0.0
          %752 = vmatprep.subr.mxu0 0.0
          %753 = vmatpush1.msra.mxu0 0.0
          %754 = vmatprep.subr.mxu0 0.0
          %755 = vmatpush1.msra.mxu0 0.0
          %756 = vmatprep.subr.mxu0 0.0
          %757 = vmatpush1.msra.mxu0 0.0
          %758 = vmatprep.subr.mxu0 0.0
          %759 = vmatpush1.msra.mxu0 0.0
          %760 = vmatprep.subr.mxu0 0.0
          %761 = vmatpush1.msra.mxu0 0.0
          %762 = vmatprep.subr.mxu0 0.0
          %763 = vmatpush1.msra.mxu0 0.0
          %764 = vmatprep.subr.mxu0 0.0
          %765 = vmatpush1.msra.mxu0 0.0
          %766 = vmatprep.subr.mxu0 0.0
          %767 = vmatpush1.msra.mxu0 0.0
          %768 = vmatprep.subr.mxu0 0.0
          %769 = vmatpush1.msra.mxu0 0.0
          %770 = vmatprep.subr.mxu0 0.0
          %771 = vmatpush1.msra.mxu0 0.0
          %772 = vmatprep.subr.mxu0 0.0
          %773 = vmatpush1.msra.mxu0 0.0
          %774 = vmatprep.subr.mxu0 0.0
          %775 = vmatpush1.msra.mxu0 0.0
          %776 = vmatprep.subr.mxu0 0.0
          %777 = vmatpush1.msra.mxu0 0.0
          %778 = vmatprep.mubr.f32.mxu0 0.0
          %779 = vmatmul.mubr.f32.gmra.mrb[0].mxu0 %v709
          %v780 = vpop.f32.mrb[0].mxu0
          %v781 = vadd.f32 0.0, %v780
          %v782 = vpop.f32.mrb[0].mxu0
          %783 = vmatprep.mubr.f32.mxu0 0.0
          %784 = vmatmul.mubr.f32.gmra.mrb[0].mxu0 %v712
          %v785 = vpop.f32.mrb[0].mxu0
          %v786 = vadd.f32 0.0, %v785
          %v787 = vpop.f32.mrb[0].mxu0
          %788 = vdwg.mxu0
          %v790 = vsel %vm204, %v704, 0
          %v793 = vsel %vm204, %v705, 0
          %795 = vmatprep.subr.mxu0 0.0
          %796 = vmatpush1.msra.mxu0 %v682
          %797 = vmatprep.subr.mxu0 0.0
          %798 = vmatpush1.msra.mxu0 %v683
          %799 = vmatprep.subr.mxu0 0.0
          %800 = vmatpush1.msra.mxu0 %v684
          %801 = vmatprep.subr.mxu0 0.0
          %802 = vmatpush1.msra.mxu0 %v685
          %803 = vmatprep.subr.mxu0 0.0
          %804 = vmatpush1.msra.mxu0 0.0
          %805 = vmatprep.subr.mxu0 0.0
          %806 = vmatpush1.msra.mxu0 0.0
          %807 = vmatprep.subr.mxu0 0.0
          %808 = vmatpush1.msra.mxu0 0.0
          %809 = vmatprep.subr.mxu0 0.0
          %810 = vmatpush1.msra.mxu0 0.0
          %811 = vmatprep.subr.mxu0 0.0
          %812 = vmatpush1.msra.mxu0 0.0
          %813 = vmatprep.subr.mxu0 0.0
          %814 = vmatpush1.msra.mxu0 0.0
          %815 = vmatprep.subr.mxu0 0.0
          %816 = vmatpush1.msra.mxu0 0.0
          %817 = vmatprep.subr.mxu0 0.0
          %818 = vmatpush1.msra.mxu0 0.0
          %819 = vmatprep.subr.mxu0 0.0
          %820 = vmatpush1.msra.mxu0 0.0
          %821 = vmatprep.subr.mxu0 0.0
          %822 = vmatpush1.msra.mxu0 0.0
          %823 = vmatprep.subr.mxu0 0.0
          %824 = vmatpush1.msra.mxu0 0.0
          %825 = vmatprep.subr.mxu0 0.0
          %826 = vmatpush1.msra.mxu0 0.0
          %827 = vmatprep.subr.mxu0 0.0
          %828 = vmatpush1.msra.mxu0 0.0
          %829 = vmatprep.subr.mxu0 0.0
          %830 = vmatpush1.msra.mxu0 0.0
          %831 = vmatprep.subr.mxu0 0.0
          %832 = vmatpush1.msra.mxu0 0.0
          %833 = vmatprep.subr.mxu0 0.0
          %834 = vmatpush1.msra.mxu0 0.0
          %835 = vmatprep.subr.mxu0 0.0
          %836 = vmatpush1.msra.mxu0 0.0
          %837 = vmatprep.subr.mxu0 0.0
          %838 = vmatpush1.msra.mxu0 0.0
          %839 = vmatprep.subr.mxu0 0.0
          %840 = vmatpush1.msra.mxu0 0.0
          %841 = vmatprep.subr.mxu0 0.0
          %842 = vmatpush1.msra.mxu0 0.0
          %843 = vmatprep.subr.mxu0 0.0
          %844 = vmatpush1.msra.mxu0 0.0
          %845 = vmatprep.subr.mxu0 0.0
          %846 = vmatpush1.msra.mxu0 0.0
          %847 = vmatprep.subr.mxu0 0.0
          %848 = vmatpush1.msra.mxu0 0.0
          %849 = vmatprep.subr.mxu0 0.0
          %850 = vmatpush1.msra.mxu0 0.0
          %851 = vmatprep.subr.mxu0 0.0
          %852 = vmatpush1.msra.mxu0 0.0
          %853 = vmatprep.subr.mxu0 0.0
          %854 = vmatpush1.msra.mxu0 0.0
          %855 = vmatprep.subr.mxu0 0.0
          %856 = vmatpush1.msra.mxu0 0.0
          %857 = vmatprep.subr.mxu0 0.0
          %858 = vmatpush1.msra.mxu0 0.0
          %859 = vmatprep.mubr.f32.mxu0 0.0
          %860 = vmatmul.mubr.f32.gmra.mrb[0].mxu0 %v790
          %v861 = vpop.f32.mrb[0].mxu0
          %v862 = vadd.f32 %v781, %v861
          %v863 = vpop.f32.mrb[0].mxu0
          %864 = vmatprep.mubr.f32.mxu0 0.0
          %865 = vmatmul.mubr.f32.gmra.mrb[0].mxu0 %v793
          %v866 = vpop.f32.mrb[0].mxu0
          %v867 = vadd.f32 %v786, %v866
          %v868 = vpop.f32.mrb[0].mxu0
          %869 = vdwg.mxu0
          %v870 = vld [vmem:[#allocation2 + $0x8] sm:$0xff]
          %v871 = vld [vmem:[#allocation2 + $0x10] sm:$0xff]
          %v873 = vsel %vm204, %v870, 0
          %v876 = vsel %vm204, %v871, 0
          %878 = vmatprep.subr.mxu0 0.0
          %879 = vmatpush1.msra.mxu0 %v690
          %880 = vmatprep.subr.mxu0 0.0
          %881 = vmatpush1.msra.mxu0 %v691
          %882 = vmatprep.subr.mxu0 0.0
          %883 = vmatpush1.msra.mxu0 %v692
          %884 = vmatprep.subr.mxu0 0.0
          %885 = vmatpush1.msra.mxu0 %v693
          %886 = vmatprep.subr.mxu0 0.0
          %887 = vmatpush1.msra.mxu0 0.0
          %888 = vmatprep.subr.mxu0 0.0
          %889 = vmatpush1.msra.mxu0 0.0
          %890 = vmatprep.subr.mxu0 0.0
          %891 = vmatpush1.msra.mxu0 0.0
          %892 = vmatprep.subr.mxu0 0.0
          %893 = vmatpush1.msra.mxu0 0.0
          %894 = vmatprep.subr.mxu0 0.0
          %895 = vmatpush1.msra.mxu0 0.0
          %896 = vmatprep.subr.mxu0 0.0
          %897 = vmatpush1.msra.mxu0 0.0
          %898 = vmatprep.subr.mxu0 0.0
          %899 = vmatpush1.msra.mxu0 0.0
          %900 = vmatprep.subr.mxu0 0.0
          %901 = vmatpush1.msra.mxu0 0.0
          %902 = vmatprep.subr.mxu0 0.0
          %903 = vmatpush1.msra.mxu0 0.0
          %904 = vmatprep.subr.mxu0 0.0
          %905 = vmatpush1.msra.mxu0 0.0
          %906 = vmatprep.subr.mxu0 0.0
          %907 = vmatpush1.msra.mxu0 0.0
          %908 = vmatprep.subr.mxu0 0.0
          %909 = vmatpush1.msra.mxu0 0.0
          %910 = vmatprep.subr.mxu0 0.0
          %911 = vmatpush1.msra.mxu0 0.0
          %912 = vmatprep.subr.mxu0 0.0
          %913 = vmatpush1.msra.mxu0 0.0
          %914 = vmatprep.subr.mxu0 0.0
          %915 = vmatpush1.msra.mxu0 0.0
          %916 = vmatprep.subr.mxu0 0.0
          %917 = vmatpush1.msra.mxu0 0.0
          %918 = vmatprep.subr.mxu0 0.0
          %919 = vmatpush1.msra.mxu0 0.0
          %920 = vmatprep.subr.mxu0 0.0
          %921 = vmatpush1.msra.mxu0 0.0
          %922 = vmatprep.subr.mxu0 0.0
          %923 = vmatpush1.msra.mxu0 0.0
          %924 = vmatprep.subr.mxu0 0.0
          %925 = vmatpush1.msra.mxu0 0.0
          %926 = vmatprep.subr.mxu0 0.0
          %927 = vmatpush1.msra.mxu0 0.0
          %928 = vmatprep.subr.mxu0 0.0
          %929 = vmatpush1.msra.mxu0 0.0
          %930 = vmatprep.subr.mxu0 0.0
          %931 = vmatpush1.msra.mxu0 0.0
          %932 = vmatprep.subr.mxu0 0.0
          %933 = vmatpush1.msra.mxu0 0.0
          %934 = vmatprep.subr.mxu0 0.0
          %935 = vmatpush1.msra.mxu0 0.0
          %936 = vmatprep.subr.mxu0 0.0
          %937 = vmatpush1.msra.mxu0 0.0
          %938 = vmatprep.subr.mxu0 0.0
          %939 = vmatpush1.msra.mxu0 0.0
          %940 = vmatprep.subr.mxu0 0.0
          %941 = vmatpush1.msra.mxu0 0.0
          %942 = vmatprep.mubr.f32.mxu0 0.0
          %943 = vmatmul.mubr.f32.gmra.mrb[0].mxu0 %v873
          %v944 = vpop.f32.mrb[0].mxu0
          %v945 = vadd.f32 0.0, %v944
          %v946 = vpop.f32.mrb[0].mxu0
          %947 = vmatprep.mubr.f32.mxu0 0.0
          %948 = vmatmul.mubr.f32.gmra.mrb[0].mxu0 %v876
          %v949 = vpop.f32.mrb[0].mxu0
          %v950 = vadd.f32 0.0, %v949
          %v951 = vpop.f32.mrb[0].mxu0
          %952 = vdwg.mxu0
          %v953 = vadd.f32 %v862, %v945
          %v954 = vadd.f32 %v867, %v950
          %v955 = vld [vmem:[#allocation2 + $0x9] sm:$0xff]
          %v956 = vld [vmem:[#allocation2 + $0x11] sm:$0xff]
          %v958 = vsel %vm204, %v955, 0
          %v961 = vsel %vm204, %v956, 0
          %963 = vmatprep.subr.mxu0 0.0
          %964 = vmatpush1.msra.mxu0 %v694
          %965 = vmatprep.subr.mxu0 0.0
          %966 = vmatpush1.msra.mxu0 %v695
          %967 = vmatprep.subr.mxu0 0.0
          %968 = vmatpush1.msra.mxu0 %v696
          %969 = vmatprep.subr.mxu0 0.0
          %970 = vmatpush1.msra.mxu0 %v697
          %971 = vmatprep.subr.mxu0 0.0
          %972 = vmatpush1.msra.mxu0 0.0
          %973 = vmatprep.subr.mxu0 0.0
          %974 = vmatpush1.msra.mxu0 0.0
          %975 = vmatprep.subr.mxu0 0.0
          %976 = vmatpush1.msra.mxu0 0.0
          %977 = vmatprep.subr.mxu0 0.0
          %978 = vmatpush1.msra.mxu0 0.0
          %979 = vmatprep.subr.mxu0 0.0
          %980 = vmatpush1.msra.mxu0 0.0
          %981 = vmatprep.subr.mxu0 0.0
          %982 = vmatpush1.msra.mxu0 0.0
          %983 = vmatprep.subr.mxu0 0.0
          %984 = vmatpush1.msra.mxu0 0.0
          %985 = vmatprep.subr.mxu0 0.0
          %986 = vmatpush1.msra.mxu0 0.0
          %987 = vmatprep.subr.mxu0 0.0
          %988 = vmatpush1.msra.mxu0 0.0
          %989 = vmatprep.subr.mxu0 0.0
          %990 = vmatpush1.msra.mxu0 0.0
          %991 = vmatprep.subr.mxu0 0.0
          %992 = vmatpush1.msra.mxu0 0.0
          %993 = vmatprep.subr.mxu0 0.0
          %994 = vmatpush1.msra.mxu0 0.0
          %995 = vmatprep.subr.mxu0 0.0
          %996 = vmatpush1.msra.mxu0 0.0
          %997 = vmatprep.subr.mxu0 0.0
          %998 = vmatpush1.msra.mxu0 0.0
          %999 = vmatprep.subr.mxu0 0.0
          %1000 = vmatpush1.msra.mxu0 0.0
          %1001 = vmatprep.subr.mxu0 0.0
          %1002 = vmatpush1.msra.mxu0 0.0
          %1003 = vmatprep.subr.mxu0 0.0
          %1004 = vmatpush1.msra.mxu0 0.0
          %1005 = vmatprep.subr.mxu0 0.0
          %1006 = vmatpush1.msra.mxu0 0.0
          %1007 = vmatprep.subr.mxu0 0.0
          %1008 = vmatpush1.msra.mxu0 0.0
          %1009 = vmatprep.subr.mxu0 0.0
          %1010 = vmatpush1.msra.mxu0 0.0
          %1011 = vmatprep.subr.mxu0 0.0
          %1012 = vmatpush1.msra.mxu0 0.0
          %1013 = vmatprep.subr.mxu0 0.0
          %1014 = vmatpush1.msra.mxu0 0.0
          %1015 = vmatprep.subr.mxu0 0.0
          %1016 = vmatpush1.msra.mxu0 0.0
          %1017 = vmatprep.subr.mxu0 0.0
          %1018 = vmatpush1.msra.mxu0 0.0
          %1019 = vmatprep.subr.mxu0 0.0
          %1020 = vmatpush1.msra.mxu0 0.0
          %1021 = vmatprep.subr.mxu0 0.0
          %1022 = vmatpush1.msra.mxu0 0.0
          %1023 = vmatprep.subr.mxu0 0.0
          %1024 = vmatpush1.msra.mxu0 0.0
          %1025 = vmatprep.subr.mxu0 0.0
          %1026 = vmatpush1.msra.mxu0 0.0
          %1027 = vmatprep.mubr.f32.mxu0 0.0
          %1028 = vmatmul.mubr.f32.gmra.mrb[0].mxu0 %v958
          %v1029 = vpop.f32.mrb[0].mxu0
          %v1030 = vadd.f32 0.0, %v1029
          %v1031 = vpop.f32.mrb[0].mxu0
          %1032 = vmatprep.mubr.f32.mxu0 0.0
          %1033 = vmatmul.mubr.f32.gmra.mrb[0].mxu0 %v961
          %v1034 = vpop.f32.mrb[0].mxu0
          %v1035 = vadd.f32 0.0, %v1034
          %v1036 = vpop.f32.mrb[0].mxu0
          %1037 = vdwg.mxu0
          %v1038 = vadd.f32 %v953, %v1030
          %v1039 = vadd.f32 %v954, %v1035
          %v1040 = vld [vmem:[#allocation2 + $0xa] sm:$0xff]
          %v1041 = vld [vmem:[#allocation2 + $0x12] sm:$0xff]
          %v1043 = vsel %vm204, %v1040, 0
          %v1046 = vsel %vm204, %v1041, 0
          %1048 = vmatprep.subr.mxu0 0.0
          %1049 = vmatpush1.msra.mxu0 %v698
          %1050 = vmatprep.subr.mxu0 0.0
          %1051 = vmatpush1.msra.mxu0 %v699
          %1052 = vmatprep.subr.mxu0 0.0
          %1053 = vmatpush1.msra.mxu0 %v700
          %1054 = vmatprep.subr.mxu0 0.0
          %1055 = vmatpush1.msra.mxu0 %v701
          %1056 = vmatprep.subr.mxu0 0.0
          %1057 = vmatpush1.msra.mxu0 0.0
          %1058 = vmatprep.subr.mxu0 0.0
          %1059 = vmatpush1.msra.mxu0 0.0
          %1060 = vmatprep.subr.mxu0 0.0
          %1061 = vmatpush1.msra.mxu0 0.0
          %1062 = vmatprep.subr.mxu0 0.0
          %1063 = vmatpush1.msra.mxu0 0.0
          %1064 = vmatprep.subr.mxu0 0.0
          %1065 = vmatpush1.msra.mxu0 0.0
          %1066 = vmatprep.subr.mxu0 0.0
          %1067 = vmatpush1.msra.mxu0 0.0
          %1068 = vmatprep.subr.mxu0 0.0
          %1069 = vmatpush1.msra.mxu0 0.0
          %1070 = vmatprep.subr.mxu0 0.0
          %1071 = vmatpush1.msra.mxu0 0.0
          %1072 = vmatprep.subr.mxu0 0.0
          %1073 = vmatpush1.msra.mxu0 0.0
          %1074 = vmatprep.subr.mxu0 0.0
          %1075 = vmatpush1.msra.mxu0 0.0
          %1076 = vmatprep.subr.mxu0 0.0
          %1077 = vmatpush1.msra.mxu0 0.0
          %1078 = vmatprep.subr.mxu0 0.0
          %1079 = vmatpush1.msra.mxu0 0.0
          %1080 = vmatprep.subr.mxu0 0.0
          %1081 = vmatpush1.msra.mxu0 0.0
          %1082 = vmatprep.subr.mxu0 0.0
          %1083 = vmatpush1.msra.mxu0 0.0
          %1084 = vmatprep.subr.mxu0 0.0
          %1085 = vmatpush1.msra.mxu0 0.0
          %1086 = vmatprep.subr.mxu0 0.0
          %1087 = vmatpush1.msra.mxu0 0.0
          %1088 = vmatprep.subr.mxu0 0.0
          %1089 = vmatpush1.msra.mxu0 0.0
          %1090 = vmatprep.subr.mxu0 0.0
          %1091 = vmatpush1.msra.mxu0 0.0
          %1092 = vmatprep.subr.mxu0 0.0
          %1093 = vmatpush1.msra.mxu0 0.0
          %1094 = vmatprep.subr.mxu0 0.0
          %1095 = vmatpush1.msra.mxu0 0.0
          %1096 = vmatprep.subr.mxu0 0.0
          %1097 = vmatpush1.msra.mxu0 0.0
          %1098 = vmatprep.subr.mxu0 0.0
          %1099 = vmatpush1.msra.mxu0 0.0
          %1100 = vmatprep.subr.mxu0 0.0
          %1101 = vmatpush1.msra.mxu0 0.0
          %1102 = vmatprep.subr.mxu0 0.0
          %1103 = vmatpush1.msra.mxu0 0.0
          %1104 = vmatprep.subr.mxu0 0.0
          %1105 = vmatpush1.msra.mxu0 0.0
          %1106 = vmatprep.subr.mxu0 0.0
          %1107 = vmatpush1.msra.mxu0 0.0
          %1108 = vmatprep.subr.mxu0 0.0
          %1109 = vmatpush1.msra.mxu0 0.0
          %1110 = vmatprep.subr.mxu0 0.0
          %1111 = vmatpush1.msra.mxu0 0.0
          %1112 = vmatprep.mubr.f32.mxu0 0.0
          %1113 = vmatmul.mubr.f32.gmra.mrb[0].mxu0 %v1043
          %v1114 = vpop.f32.mrb[0].mxu0
          %v1115 = vadd.f32 0.0, %v1114
          %v1116 = vpop.f32.mrb[0].mxu0
          %1117 = vmatprep.mubr.f32.mxu0 0.0
          %1118 = vmatmul.mubr.f32.gmra.mrb[0].mxu0 %v1046
          %v1119 = vpop.f32.mrb[0].mxu0
          %v1120 = vadd.f32 0.0, %v1119
          %v1121 = vpop.f32.mrb[0].mxu0
          %1122 = vdwg.mxu0
          %v1123 = vadd.f32 %v1038, %v1115
          %v1124 = vadd.f32 %v1039, %v1120
          %v1126 = vlaneseq
          %v1127 = vshrl.u32 %v1126, 7
          %v1128 = vsub.s32 0, %v1127
          %v1129 = vrot.slane %v703, %v1128
          %v1131 = vadd.f32 %v1123, %v1129
          %v1132 = vadd.f32 %v1124, %v1129
          %vm1133 = vcmp.ge.f32.partialorder %v1131, 0.0
          %vm1134 = vcmp.ge.f32.partialorder %v1132, 0.0
          %v1135 = vmul.f32 %v1131, 0.01
          %v1136 = vmul.f32 %v1132, 0.01
          %v1137 = vsel %vm1133, %v1131, %v1135
          %v1138 = vsel %vm1134, %v1132, %v1136
          %v1139 = vadd.f32 %v1137, %v217
          %v1140 = vadd.f32 %v1138, %v218
          %v1141 = vmul.f32 %v1139, 0.5
          %v1142 = vmul.f32 %v1140, 0.5
          %1143 = vst.msk [vmem:[#allocation2 + $0x8] sm:$0xff] %vm204, %v1141
          %1144 = vst.msk [vmem:[#allocation2 + $0x10] sm:$0xff] %vm204, %v1142
        $region45: #{tpu_custom_call.1} parent=31 // loop_footer
          %s216 = sadd.s32 1, %s212
        $region46: #{tpu_custom_call.1} parent=31 // loop_footer_branch
          %211 = sbr.rel target = $region42
        $region47: #{tpu_custom_call.1} parent=31 // loop_exit
          _
        %v1145 = vld [vmem:[#allocation2 + $0x8] sm:$0xff]
        %v1146 = vld [vmem:[#allocation2 + $0x10] sm:$0xff]
        %1147 = vst.msk [vmem:[%s203] sm:$0xff] %vm204, %v1145
        %1148 = vst.msk [vmem:[%s203 + $0x8] sm:$0xff] %vm204, %v1146
        %s1149 = sand.u32 %s97, 1
        %s1150 = scalar_lea.sflag [#allocation5], %s1149
        %s1151 = sand.u32 %s97, 1
        %s1152 = smul.addr %s1151, 16
        %s1153 = scalar_lea.vmem [#allocation8], %s1152
        // Predicated region
        $region48: #{tpu_custom_call.1} parent=31 // pred_check
          %p1154 = pneg %p107
        $region49: #{tpu_custom_call.1} parent=31 // pred_check_branch
          %1156 = sbr.rel (%p1154) target = $region51
        $region50: #{tpu_custom_call.1} parent=31 // pred_region
          %s1158 = ssub.s32 256, 256
          %1159 = vsyncadd %s1150, %s1158
          %s1160 = smul.addr %s21, 2
          %s1161 = smul.addr %s1160, 128
          %s1162 = scalar_lea.hbm %s3, %s1161
          %s1163 = sshll.u32 %s1153, 4
          %s1164 = int_to_ptr.vmem [resolvable:$true] %s1163
          %1169 = dma.vmem_to_hbm [thread:$0]  %s1164, 256, %s1162, %s1150, 128, 128, 8
        $region51: #{tpu_custom_call.1} parent=31 // pred_fallthru
          _
      $region32: #{tpu_custom_call.1} parent=5 // pred_fallthru
        _
      %p1170 = scmp.le.s32.totalorder 2, %s16
      // Predicated region
      $region52: #{tpu_custom_call.1} parent=5 // pred_check
        %p1171 = pneg %p1170
      $region53: #{tpu_custom_call.1} parent=5 // pred_check_branch
        %1173 = sbr.rel (%p1171) target = $region55
      $region54: #{tpu_custom_call.1} parent=5 // pred_region
        %s1174 = ssub.s32 %s16, 2
        // Predicated region
        $region56: #{tpu_custom_call.1} parent=54 // pred_check
          %p1175 = pneg %p113
        $region57: #{tpu_custom_call.1} parent=54 // pred_check_branch
          %1177 = sbr.rel (%p1175) target = $region59
        $region58: #{tpu_custom_call.1} parent=54 // pred_region
          %s1178 = sand.u32 %s98, 1
          %s1179 = scalar_lea.sflag [#allocation5], %s1178
          %s1180 = sand.u32 %s98, 1
          %s1181 = smul.addr %s1180, 16
          %s1182 = scalar_lea.vmem [#allocation8], %s1181
          %1183 = dma.done %s1179, 256
        $region59: #{tpu_custom_call.1} parent=54 // pred_fallthru
          _
      $region55: #{tpu_custom_call.1} parent=5 // pred_fallthru
        _
    $region6: #{tpu_custom_call.1} parent=1 // loop_footer
      %s20 = sadd.s32 1, %s16
    $region7: #{tpu_custom_call.1} parent=1 // loop_footer_branch
      %15 = sbr.rel target = $region3
    $region8: #{tpu_custom_call.1} parent=1 // loop_exit
      _
    %1184 = vsyncpa [#allocation4], 1
    %s1185 = scalar_lea.sflag [#allocation4], 1
    %1186 = vsyncpa %s1185, 1
    %1187 = vsyncpa [#allocation7], 1
    %1188 = vsyncpa [#allocation5], 1
    %s1189 = scalar_lea.sflag [#allocation5], 1
    %1190 = vsyncpa %s1189, 1

</llo_original>
